<compile_context>
chip_gen: v5e
topology: v5e:2x2
jax: 0.10.0
libtpu: 0.0.40
codegen_flags: <defaults>
</compile_context>

<pallas_src>
import functools

import jax
import jax.numpy as jnp
from jax.experimental import pallas as pl
from jax.experimental.pallas import tpu as pltpu


def _round_up(x, m):
    return (x + m - 1) // m * m


def _intensity_kernel(h_ref, w_ref, b_ref, ev_ref, out_ref, *, n_types):
    # h_ref : (tm, E)      hidden-state tile (stream dtype; f32 or bf16)
    # w_ref : (E, Kp)      linear weight (zero-padded to Kp types), resident
    # b_ref : (1, Kp)      bias (zero-padded), f32, resident
    # ev_ref: (1, 1, tm)   event types for this tile, int32 (1..K valid, 0 = pad)
    # out_ref:(1, 1, tm)   conditional intensity row (lane-dense)
    z = jnp.dot(h_ref[...], w_ref[...], preferred_element_type=jnp.float32)
    z = z + b_ref[...]                                   # (tm, Kp) f32

    # Transposed, lane-dense epilogue: the tiny (tm, Kp) -> (Kp, tm) transpose
    # rides the otherwise-idle XLU; everything after runs with all 128 lanes
    # busy and the K-reduction is a depth-3 sublane add.
    zt = z.T                                             # (Kp, tm)
    ev = ev_ref[0]                                       # (1, tm) int32

    # One-hot select the event type's intensity term BEFORE softplus:
    # only tm (not Kp*tm) elements hit the EUP.
    k_ids = jax.lax.broadcasted_iota(jnp.int32, zt.shape, 0)   # (Kp, tm)
    onehot = (ev == (k_ids + 1)).astype(zt.dtype)              # (Kp, tm)
    zsel = jnp.sum(zt * onehot, axis=0, keepdims=True)         # (1, tm)

    # torch.nn.Softplus(beta=1, threshold=10):
    #   x               if x > 10
    #   log(1+exp(x))   otherwise (clamp before exp so unused branch is finite)
    sp = jnp.where(zsel > 10.0, zsel,
                   jnp.log1p(jnp.exp(jnp.minimum(zsel, 10.0))))

    # Rows whose event type is outside 1..K (padding rows, and the OOB-garbage
    # rows of the ragged last h tile) must be exactly 0, matching torch's
    # all-zero one-hot mask.  This also kills any NaNs from the garbage rows.
    valid = (ev >= 1) & (ev <= n_types)
    out_ref[0] = jnp.where(valid, sp, 0.0)               # (1, tm) unmasked store


def _vmem_capacity_bytes():
    try:
        return int(pltpu.get_tpu_info().vmem_capacity_bytes)
    except Exception:
        return 64 << 20      # conservative fallback (v7x per-TensorCore VMEM)


def _choose_tiling(m_rows, embed, dtype_bytes):
    """Byte-budgeted row-tile size + scoped-VMEM limit."""
    vmem_cap = _vmem_capacity_bytes()
    # ~60% of physical VMEM, capped at 40 MiB (fits v7x's 64 MiB comfortably).
    budget = min(int(vmem_cap * 0.6), 40 << 20)
    # Per-row VMEM cost: 2x (double-buffer) h row, z row ((tm, 8) f32 is
    # lane-padded to 128 => 512 B/row), ~1 KiB/row slack for epilogue temps.
    per_row = 2 * embed * dtype_bytes + 512 + 1024
    tile_m = budget // per_row
    tile_m = min(tile_m, 16384)                     # diminishing returns past here
    tile_m = max(128, (tile_m // 128) * 128)
    tile_m = min(tile_m, max(128, _round_up(m_rows, 128)))
    # >= 4 grid steps when m_rows allows: 2 per TensorCore on v7x keeps both
    # cores double-buffered; harmless on single-core chips.
    while tile_m > 128 and pl.cdiv(m_rows, tile_m) < 4:
        tile_m = max(128, _round_up(tile_m // 2, 128))

    # Per-step working set -> scoped-VMEM limit (defaults are 16/32/32 MiB on
    # v5e/v6e/v7x; raise explicitly when big-E tiles need more).
    est = 2 * tile_m * embed * dtype_bytes + tile_m * 512 + tile_m * 1024
    vmem_limit = int(min(max(32 << 20, 2 * est), vmem_cap - (8 << 20)))
    return tile_m, vmem_limit


def intensity_forward(hidden_states, events, weight, bias, *, stream_dtype=None):
    """Pallas equivalent of IntensityNetwork.forward(hidden, events), default path.

    hidden_states: (B, S, E) float32 or bfloat16
    events       : (B, S)    int (event types in 1..K, 0 = padding)
    weight       : (E, K)    float (transposed torch nn.Linear weight)
    bias         : (K,)      float
    stream_dtype : optional dtype to stream hidden states in (e.g. jnp.bfloat16)
                   -- halves HBM traffic; None keeps the input dtype (no cast).
    returns      : (B, S)    float32 conditional intensity
    """
    B, S, E = hidden_states.shape
    K = weight.shape[1]
    M = B * S

    h = hidden_states.reshape(M, E)
    if stream_dtype is not None and h.dtype != stream_dtype:
        h = h.astype(stream_dtype)
    dtype_bytes = jnp.dtype(h.dtype).itemsize

    # Only pad h when M is smaller than one minimal tile (cheap).  Otherwise h
    # is passed UNPADDED: the ragged last block reads OOB garbage which the
    # kernel's valid-event mask neutralises -- this avoids the full HBM copy a
    # jnp.pad of (M, E) would cost.
    if M < 128:
        h = jnp.pad(h, ((0, 128 - M), (0, 0)))
    M_rows = h.shape[0]

    tile_m, vmem_limit = _choose_tiling(M_rows, E, dtype_bytes)
    n_tiles = pl.cdiv(M_rows, tile_m)
    M_pad = n_tiles * tile_m

    # events: lane-dense (n_tiles, 1, tile_m) rows; padding is 4 B/row (cheap).
    ev = events.reshape(M).astype(jnp.int32)
    if M_pad != M:
        ev = jnp.pad(ev, (0, M_pad - M))                 # 0 => zero intensity
    ev = ev.reshape(n_tiles, 1, tile_m)

    # Pad K only to one sublane group (8); padded types are never selected.
    K_pad = max(8, _round_up(K, 8))
    w = weight.astype(h.dtype)
    if K_pad != K:
        w = jnp.pad(w, ((0, 0), (0, K_pad - K)))
    b2 = bias.astype(jnp.float32)
    if K_pad != K:
        b2 = jnp.pad(b2, (0, K_pad - K))
    b2 = b2.reshape(1, K_pad)

    kernel = functools.partial(_intensity_kernel, n_types=K)

    out = pl.pallas_call(
        kernel,
        out_shape=jax.ShapeDtypeStruct((n_tiles, 1, tile_m), jnp.float32),
        grid_spec=pltpu.PrefetchScalarGridSpec(
            num_scalar_prefetch=0,
            grid=(n_tiles,),
            in_specs=[
                pl.BlockSpec((tile_m, E), lambda i: (i, 0)),        # hidden tile
                pl.BlockSpec((E, K_pad), lambda i: (0, 0)),         # weight (resident)
                pl.BlockSpec((1, K_pad), lambda i: (0, 0)),         # bias   (resident)
                pl.BlockSpec((1, 1, tile_m), lambda i: (i, 0, 0)),  # events row
            ],
            out_specs=pl.BlockSpec((1, 1, tile_m), lambda i: (i, 0, 0)),
        ),
        compiler_params=pltpu.CompilerParams(
            dimension_semantics=("parallel",),
            vmem_limit_bytes=vmem_limit,
        ),
    )(h, w, b2, ev)

    return out.reshape(M_pad)[:M].reshape(B, S)


def _reference_forward(hidden_states, events, weight, bias):
    """Pure-JAX reference mirroring the PyTorch forward (mc_trick=False)."""
    z = jnp.einsum("bse,ek->bsk", hidden_states.astype(jnp.float32),
                   weight.astype(jnp.float32)) + bias.astype(jnp.float32)
    sp = jnp.where(z > 10.0, z, jnp.log1p(jnp.exp(jnp.minimum(z, 10.0))))
    K = weight.shape[1]
    k_ids = jnp.arange(1, K + 1)
    type_mask = (events[..., None] == k_ids[None, None, :]).astype(z.dtype)
    return jnp.sum(sp * type_mask, axis=2)


if __name__ == "__main__":
    # Small shapes consistent with the module: B=2, S=8, E(hidden)=32, K=4 types.
    B, S, E, K = 2, 8, 32, 4

    key = jax.random.PRNGKey(0)
    k_h, k_e, k_w, k_b = jax.random.split(key, 4)

    hidden_states = jax.random.normal(k_h, (B, S, E), dtype=jnp.float32)
    # event types in 0..K (0 plays the role of padding -> zero intensity)
    events = jax.random.randint(k_e, (B, S), 0, K + 1, dtype=jnp.int32)

    # Deterministic nn.Linear-style init: U(-1/sqrt(E), 1/sqrt(E))
    bound = 1.0 / (E ** 0.5)
    weight = jax.random.uniform(k_w, (E, K), minval=-bound, maxval=bound,
                                dtype=jnp.float32)
    bias = jax.random.uniform(k_b, (K,), minval=-bound, maxval=bound,
                              dtype=jnp.float32)

    out = jax.block_until_ready(intensity_forward(hidden_states, events, weight, bias))
    ref = _reference_forward(hidden_states, events, weight, bias)
    assert out.shape == (B, S)
    assert jnp.allclose(out, ref, atol=1e-5, rtol=1e-5), "mismatch vs reference"

    # Ragged case: M = 150 (not a multiple of 128) -> h streamed UNPADDED with a
    # 2-step grid; exercises the OOB-garbage last-tile handling.
    B2, S2 = 3, 50
    k_h2, k_e2 = jax.random.split(k_h)
    h2 = jax.random.normal(k_h2, (B2, S2, E), dtype=jnp.float32)
    e2 = jax.random.randint(k_e2, (B2, S2), 0, K + 1, dtype=jnp.int32)
    out2 = jax.block_until_ready(intensity_forward(h2, e2, weight, bias))
    ref2 = _reference_forward(h2, e2, weight, bias)
    assert out2.shape == (B2, S2)
    assert jnp.allclose(out2, ref2, atol=1e-5, rtol=1e-5), "mismatch vs reference (ragged case)"

    # bf16-streamed path (halves HBM traffic); looser tolerance for the cast.
    out3 = jax.block_until_ready(
        intensity_forward(h2, e2, weight, bias, stream_dtype=jnp.bfloat16))
    assert out3.shape == (B2, S2)
    assert jnp.allclose(out3, ref2, atol=5e-2, rtol=5e-2), "mismatch vs reference (bf16 stream)"

    print("KERNEL_OK")
</pallas_src>

<mosaic_0001>
module attributes {stable_mosaic.version = 11 : i64} {
  func.func @_intensity_kernel(%arg0: i32, %arg1: memref<128x32xf32, #tpu.memory_space<vmem>>, %arg2: memref<32x8xf32, #tpu.memory_space<vmem>>, %arg3: memref<1x8xf32, #tpu.memory_space<vmem>>, %arg4: memref<1x1x128xi32, #tpu.memory_space<vmem>>, %arg5: memref<1x1x128xf32, #tpu.memory_space<vmem>>) attributes {dimension_semantics = [#tpu.dimension_semantics<parallel>], iteration_bounds = array<i64: 1>, scalar_prefetch = 0 : i64, scratch_operands = 0 : i64, tpu.core_type = #tpu.core_type<tc>, window_params = [{transform_indices = @transform_0, window_bounds = array<i64: 128, 32>}, {pipeline_mode = #tpu.pipeline_mode<synchronous>, transform_indices = @transform_1, window_bounds = array<i64: 32, 8>}, {pipeline_mode = #tpu.pipeline_mode<synchronous>, transform_indices = @transform_2, window_bounds = array<i64: 1, 8>}, {transform_indices = @transform_3, window_bounds = array<i64: 1, 1, 128>}, {transform_indices = @transform_4, window_bounds = array<i64: 1, 1, 128>}]} {
    %c0 = arith.constant 0 : index
    %c0_0 = arith.constant 0 : index
    %0 = vector.load %arg1[%c0, %c0_0] : memref<128x32xf32, #tpu.memory_space<vmem>>, vector<128x32xf32>
    %c0_1 = arith.constant 0 : index
    %c0_2 = arith.constant 0 : index
    %1 = vector.load %arg2[%c0_1, %c0_2] : memref<32x8xf32, #tpu.memory_space<vmem>>, vector<32x8xf32>
    %cst = arith.constant dense<0.000000e+00> : vector<128x8xf32>
    %2 = tpu.matmul %0, %1, %cst {dimension_numbers = #tpu.dot_dimension_numbers<[1], [0], [0], [1], [0, 0, 1, 1], [], []>} : vector<128x32xf32>, vector<32x8xf32>, vector<128x8xf32> -> vector<128x8xf32>
    %c0_3 = arith.constant 0 : index
    %c0_4 = arith.constant 0 : index
    %3 = vector.load %arg3[%c0_3, %c0_4] : memref<1x8xf32, #tpu.memory_space<vmem>>, vector<1x8xf32>
    %4 = vector.broadcast %3 : vector<1x8xf32> to vector<128x8xf32>
    %5 = arith.addf %2, %4 : vector<128x8xf32>
    %6 = tpu.transpose %5, [1, 0] : vector<128x8xf32> -> vector<8x128xf32>
    %c0_5 = arith.constant 0 : index
    %c0_6 = arith.constant 0 : index
    %c0_7 = arith.constant 0 : index
    %7 = vector.load %arg4[%c0_5, %c0_6, %c0_7] : memref<1x1x128xi32, #tpu.memory_space<vmem>>, vector<1x1x128xi32>
    %8 = vector.shape_cast %7 : vector<1x1x128xi32> to vector<1x128xi32>
    %9 = tpu.iota {dimensions = array<i32: 0>} : vector<8x128xi32>
    %c1_i32 = arith.constant 1 : i32
    %10 = vector.broadcast %c1_i32 : i32 to vector<8x128xi32>
    %11 = arith.addi %9, %10 : vector<8x128xi32>
    %12 = vector.broadcast %8 : vector<1x128xi32> to vector<8x128xi32>
    %13 = arith.cmpi eq, %12, %11 : vector<8x128xi32>
    %14 = arith.extui %13 : vector<8x128xi1> to vector<8x128xi32>
    %15 = arith.sitofp %14 : vector<8x128xi32> to vector<8x128xf32>
    %16 = arith.mulf %6, %15 : vector<8x128xf32>
    %cst_8 = arith.constant dense<0.000000e+00> : vector<128xf32>
    %17 = vector.multi_reduction <add>, %16, %cst_8 [0] : vector<8x128xf32> to vector<128xf32>
    %18 = vector.shape_cast %17 : vector<128xf32> to vector<1x128xf32>
    %cst_9 = arith.constant 1.000000e+01 : f32
    %19 = vector.broadcast %cst_9 : f32 to vector<1x128xf32>
    %20 = arith.cmpf ogt, %18, %19 : vector<1x128xf32>
    %cst_10 = arith.constant 1.000000e+01 : f32
    %21 = vector.broadcast %cst_10 : f32 to vector<1x128xf32>
    %22 = arith.minimumf %18, %21 : vector<1x128xf32>
    %23 = math.exp %22 : vector<1x128xf32>
    %24 = math.log1p %23 : vector<1x128xf32>
    %25 = arith.select %20, %18, %24 : vector<1x128xi1>, vector<1x128xf32>
    %c1_i32_11 = arith.constant 1 : i32
    %26 = vector.broadcast %c1_i32_11 : i32 to vector<1x128xi32>
    %27 = arith.cmpi sge, %8, %26 : vector<1x128xi32>
    %c4_i32 = arith.constant 4 : i32
    %28 = vector.broadcast %c4_i32 : i32 to vector<1x128xi32>
    %29 = arith.cmpi sle, %8, %28 : vector<1x128xi32>
    %30 = arith.andi %27, %29 : vector<1x128xi1>
    %cst_12 = arith.constant 0.000000e+00 : f32
    %31 = vector.broadcast %cst_12 : f32 to vector<1x128xf32>
    %32 = arith.select %30, %25, %31 : vector<1x128xi1>, vector<1x128xf32>
    %c0_13 = arith.constant 0 : index
    %c0_14 = arith.constant 0 : index
    %c0_15 = arith.constant 0 : index
    %33 = vector.load %arg5[%c0_13, %c0_14, %c0_15] : memref<1x1x128xf32, #tpu.memory_space<vmem>>, vector<1x1x128xf32>
    %34 = vector.shape_cast %33 : vector<1x1x128xf32> to vector<1x128xf32>
    %35 = vector.shape_cast %32 : vector<1x128xf32> to vector<1x1x128xf32>
    tpu.vector_store %arg5[%c0_13, %c0_14, %c0_15], %35 {strides = array<i32>} : memref<1x1x128xf32, #tpu.memory_space<vmem>>, vector<1x1x128xf32>,
    return
  }
  func.func @transform_0(%arg0: i32) -> (i32, i32) {
    %c0_i32 = arith.constant 0 : i32
    %c0_i32_0 = arith.constant 0 : i32
    return %arg0, %c0_i32 : i32, i32
  }
  func.func @transform_1(%arg0: i32) -> (i32, i32) {
    %c0_i32 = arith.constant 0 : i32
    %c0_i32_0 = arith.constant 0 : i32
    %c0_i32_1 = arith.constant 0 : i32
    return %c0_i32, %c0_i32_0 : i32, i32
  }
  func.func @transform_2(%arg0: i32) -> (i32, i32) {
    %c0_i32 = arith.constant 0 : i32
    %c0_i32_0 = arith.constant 0 : i32
    %c0_i32_1 = arith.constant 0 : i32
    return %c0_i32, %c0_i32_0 : i32, i32
  }
  func.func @transform_3(%arg0: i32) -> (i32, i32, i32) {
    %c0_i32 = arith.constant 0 : i32
    %c0_i32_0 = arith.constant 0 : i32
    %c0_i32_1 = arith.constant 0 : i32
    return %arg0, %c0_i32, %c0_i32_0 : i32, i32, i32
  }
  func.func @transform_4(%arg0: i32) -> (i32, i32, i32) {
    %c0_i32 = arith.constant 0 : i32
    %c0_i32_0 = arith.constant 0 : i32
    %c0_i32_1 = arith.constant 0 : i32
    return %arg0, %c0_i32, %c0_i32_0 : i32, i32, i32
  }
}

</mosaic_0001>

<llo_original>
// kernel: tpu_custom_call.1
$region0: #{tpu_custom_call.1}
  #allocation0 [shape = 'u32[]', space=smem, size = 0x4, offset = 0x4, fixed_abs, tag = 'smem constant byte address 0x4 - core index']
  #allocation1 [shape = 'u32[72,128]{1,0:T(1,128)}', space=vmem, size = 0x9000, scoped, tag = 'internal scratch']
  %s0 = inlined_call_operand.vmem [shape: f32[128,32], index: 0, kind: input, shape index: {}]
  %s1 = inlined_call_operand.vmem [shape: f32[32,8], index: 1, kind: input, shape index: {}]
  %s2 = inlined_call_operand.vmem [shape: f32[1,8], index: 2, kind: input, shape index: {}]
  %s3 = inlined_call_operand.vmem [shape: s32[1,1,128], index: 3, kind: input, shape index: {}]
  %s4 = inlined_call_operand.hbm [shape: f32[1,1,128], index: 4, kind: output, shape index: {}]
  %s5 = sld [smem:[#allocation0]]
  $region26: #{tpu_custom_call.1} parent=0
    _
  %s7 = ssub.s32 1, %s5
  %s8 = scalar_select 0, %s7, %s5
  $region1: #{tpu_custom_call.1} parent=0
    #allocation2 [shape = 'u8[512]{0}', space=vmem, size = 0x400, scoped, tag = 'output window, operand 0, single buffered']
    #allocation3 [shape = 's32[1]{0}', space=sflag, size = 0x4, scoped, tag = 'scoped memory for tpu_custom_call.1']
    %9 = vsyncpa [#allocation3], 0
    // Predicated region
    $region2: #{tpu_custom_call.1} parent=1 // pred_check
      _
    $region3: #{tpu_custom_call.1} parent=1 // pred_check_branch
      %11 = sbr.rel (0) target = $region5
    $region4: #{tpu_custom_call.1} parent=1 // pred_region
      _
    $region5: #{tpu_custom_call.1} parent=1 // pred_fallthru
      _
    // Predicated region
    $region6: #{tpu_custom_call.1} parent=1 // pred_check
      _
    $region7: #{tpu_custom_call.1} parent=1 // pred_check_branch
      %13 = sbr.rel (0) target = $region9
    $region8: #{tpu_custom_call.1} parent=1 // pred_region
      _
    $region9: #{tpu_custom_call.1} parent=1 // pred_fallthru
      _
    // Predicated region
    $region10: #{tpu_custom_call.1} parent=1 // pred_check
      _
    $region11: #{tpu_custom_call.1} parent=1 // pred_check_branch
      %15 = sbr.rel (0) target = $region13
    $region12: #{tpu_custom_call.1} parent=1 // pred_region
      _
    $region13: #{tpu_custom_call.1} parent=1 // pred_fallthru
      _
    // Predicated region
    $region14: #{tpu_custom_call.1} parent=1 // pred_check
      _
    $region15: #{tpu_custom_call.1} parent=1 // pred_check_branch
      %17 = sbr.rel (0) target = $region17
    $region16: #{tpu_custom_call.1} parent=1 // pred_region
      _
    $region17: #{tpu_custom_call.1} parent=1 // pred_fallthru
      _
    %v18 = vld [vmem:[%s0] sm:$0xff]
    %v19 = vld [vmem:[%s0 + $0x8] sm:$0xff]
    %v20 = vld [vmem:[%s0 + $0x10] sm:$0xff]
    %v21 = vld [vmem:[%s0 + $0x18] sm:$0xff]
    %v22 = vld [vmem:[%s0 + $0x20] sm:$0xff]
    %v23 = vld [vmem:[%s0 + $0x28] sm:$0xff]
    %v24 = vld [vmem:[%s0 + $0x30] sm:$0xff]
    %v25 = vld [vmem:[%s0 + $0x38] sm:$0xff]
    %v26 = vld [vmem:[%s0 + $0x40] sm:$0xff]
    %v27 = vld [vmem:[%s0 + $0x48] sm:$0xff]
    %v28 = vld [vmem:[%s0 + $0x50] sm:$0xff]
    %v29 = vld [vmem:[%s0 + $0x58] sm:$0xff]
    %v30 = vld [vmem:[%s0 + $0x60] sm:$0xff]
    %v31 = vld [vmem:[%s0 + $0x68] sm:$0xff]
    %v32 = vld [vmem:[%s0 + $0x70] sm:$0xff]
    %v33 = vld [vmem:[%s0 + $0x78] sm:$0xff]
    %v34 = vld [vmem:[%s1] sm:$0xff]
    %v35 = vld [vmem:[%s1 + $0x8] sm:$0xff]
    %v36 = vld [vmem:[%s1 + $0x10] sm:$0xff]
    %v37 = vld [vmem:[%s1 + $0x18] sm:$0xff]
    %v38 = vld [vmem:[%s2] sm:$0x1]
    %v40 = vperm.slane %v38, 0
    %vm42 = vcmask 261120
    %v44 = vsel %vm42, %v18, 0
    %v47 = vsel %vm42, %v19, 0
    %v50 = vsel %vm42, %v20, 0
    %v53 = vsel %vm42, %v21, 0
    %v56 = vsel %vm42, %v22, 0
    %v59 = vsel %vm42, %v23, 0
    %v62 = vsel %vm42, %v24, 0
    %v65 = vsel %vm42, %v25, 0
    %v68 = vsel %vm42, %v26, 0
    %v71 = vsel %vm42, %v27, 0
    %v74 = vsel %vm42, %v28, 0
    %v77 = vsel %vm42, %v29, 0
    %v80 = vsel %vm42, %v30, 0
    %v83 = vsel %vm42, %v31, 0
    %v86 = vsel %vm42, %v32, 0
    %v89 = vsel %vm42, %v33, 0
    %91 = vmatpush.msra.mxu0 0.0
    %92 = vmatpush.msra.mxu0 0.0
    %93 = vmatpush.msra.mxu0 0.0
    %94 = vmatpush.msra.mxu0 0.0
    %95 = vmatpush.msra.mxu0 0.0
    %96 = vmatpush.msra.mxu0 0.0
    %97 = vmatpush.msra.mxu0 0.0
    %98 = vmatpush.msra.mxu0 0.0
    %99 = vmatpush.msra.mxu0 0.0
    %100 = vmatpush.msra.mxu0 0.0
    %101 = vmatpush.msra.mxu0 0.0
    %102 = vmatpush.msra.mxu0 0.0
    %103 = vmatpush.msra.mxu0 %v37
    %104 = vmatpush.msra.mxu0 %v36
    %105 = vmatpush.msra.mxu0 %v35
    %106 = vmatpush.msra.mxu0 %v34
    %107 = vmatmul.f32.gmra.mxu0 %v44
    %v108 = vpop.f32.mrf.mxu0
    %v109 = vadd.f32 %v40, %v108
    %110 = vmatmul.f32.gmra.mxu0 %v47
    %v111 = vpop.f32.mrf.mxu0
    %v112 = vadd.f32 %v40, %v111
    %113 = vmatmul.f32.gmra.mxu0 %v50
    %v114 = vpop.f32.mrf.mxu0
    %v115 = vadd.f32 %v40, %v114
    %116 = vmatmul.f32.gmra.mxu0 %v53
    %v117 = vpop.f32.mrf.mxu0
    %v118 = vadd.f32 %v40, %v117
    %119 = vmatmul.f32.gmra.mxu0 %v56
    %v120 = vpop.f32.mrf.mxu0
    %v121 = vadd.f32 %v40, %v120
    %122 = vmatmul.f32.gmra.mxu0 %v59
    %v123 = vpop.f32.mrf.mxu0
    %v124 = vadd.f32 %v40, %v123
    %125 = vmatmul.f32.gmra.mxu0 %v62
    %v126 = vpop.f32.mrf.mxu0
    %v127 = vadd.f32 %v40, %v126
    %128 = vmatmul.f32.gmra.mxu0 %v65
    %v129 = vpop.f32.mrf.mxu0
    %v130 = vadd.f32 %v40, %v129
    %131 = vmatmul.f32.gmra.mxu0 %v68
    %v132 = vpop.f32.mrf.mxu0
    %v133 = vadd.f32 %v40, %v132
    %134 = vmatmul.f32.gmra.mxu0 %v71
    %v135 = vpop.f32.mrf.mxu0
    %v136 = vadd.f32 %v40, %v135
    %137 = vmatmul.f32.gmra.mxu0 %v74
    %v138 = vpop.f32.mrf.mxu0
    %v139 = vadd.f32 %v40, %v138
    %140 = vmatmul.f32.gmra.mxu0 %v77
    %v141 = vpop.f32.mrf.mxu0
    %v142 = vadd.f32 %v40, %v141
    %143 = vmatmul.f32.gmra.mxu0 %v80
    %v144 = vpop.f32.mrf.mxu0
    %v145 = vadd.f32 %v40, %v144
    %146 = vmatmul.f32.gmra.mxu0 %v83
    %v147 = vpop.f32.mrf.mxu0
    %v148 = vadd.f32 %v40, %v147
    %149 = vmatmul.f32.gmra.mxu0 %v86
    %v150 = vpop.f32.mrf.mxu0
    %v151 = vadd.f32 %v40, %v150
    %152 = vmatmul.f32.gmra.mxu0 %v89
    %v153 = vpop.f32.mrf.mxu0
    %v154 = vadd.f32 %v40, %v153
    %155 = vdwg.mxu0
    %156 = vxpose.xlu0.b32.start [1/16] %v109, 128
    %157 = vxpose.xlu0.b32.cont [2/16] %v112, 128
    %158 = vxpose.xlu0.b32.cont [3/16] %v115, 128
    %159 = vxpose.xlu0.b32.cont [4/16] %v118, 128
    %160 = vxpose.xlu0.b32.cont [5/16] %v121, 128
    %161 = vxpose.xlu0.b32.cont [6/16] %v124, 128
    %162 = vxpose.xlu0.b32.cont [7/16] %v127, 128
    %163 = vxpose.xlu0.b32.cont [8/16] %v130, 128
    %164 = vxpose.xlu0.b32.cont [9/16] %v133, 128
    %165 = vxpose.xlu0.b32.cont [10/16] %v136, 128
    %166 = vxpose.xlu0.b32.cont [11/16] %v139, 128
    %167 = vxpose.xlu0.b32.cont [12/16] %v142, 128
    %168 = vxpose.xlu0.b32.cont [13/16] %v145, 128
    %169 = vxpose.xlu0.b32.cont [14/16] %v148, 128
    %170 = vxpose.xlu0.b32.cont [15/16] %v151, 128
    %171 = vxpose.xlu0.b32.end [16/16] %v154, 128
    %v172 = vpop.trf.xlu0
    %v173 = vpop.trf.xlu0
    %v174 = vpop.trf.xlu0
    %v175 = vpop.trf.xlu0
    %v176 = vpop.trf.xlu0
    %v177 = vpop.trf.xlu0
    %v178 = vpop.trf.xlu0
    %v179 = vpop.trf.xlu0
    %v180 = vpop.trf.xlu0
    %v181 = vpop.trf.xlu0
    %v182 = vpop.trf.xlu0
    %v183 = vpop.trf.xlu0
    %v184 = vpop.trf.xlu0
    %v185 = vpop.trf.xlu0
    %v186 = vpop.trf.xlu0
    %v187 = vpop.trf.xlu0
    %v188 = vld [vmem:[%s3] sm:$0x1]
    %v189 = vlaneseq
    %v190 = vshrl.u32 %v189, 7
    %v191 = vadd.s32 %v190, 1
    %v192 = vperm.slane %v188, 0
    %vm193 = vcmp.eq.s32.totalorder %v192, %v191
    %v194 = vsel %vm193, 1, 0
    %v195 = vcvt.s32.f32 %v194
    %v196 = vmul.f32 %v172, %v195
    %v197 = vrot.slane %v196, 4
    %v198 = vadd.f32 %v196, %v197
    %v199 = vrot.slane %v198, 2
    %v200 = vadd.f32 %v198, %v199
    %v201 = vrot.slane %v200, 1
    %v202 = vadd.f32 %v200, %v201
    %vm203 = vcmp.gt.f32.partialorder %v202, 10.0
    %v204 = vmin.f32 %v202, 10.0
    %v205 = vmul.f32 %v204, 1.442695
    %v206 = vpow.pop %v205
    %v207 = vadd.f32 %v206, 1.0
    %v208 = vlog2.pop %v207
    %v209 = vmul.f32 %v208, 0.6931472
    %v210 = vmul.f32 -0.5, %v206
    %v211 = vadd.f32 %v210, 1.0
    %v212 = vmul.f32 %v211, %v206
    %v213 = vand.u32 2147483647, %v206
    %vm214 = vcmp.lt.f32.partialorder %v213, 0.0004427343
    %v215 = vsel %vm214, %v212, %v209
    %v216 = vsel %vm203, %v202, %v215
    %vm217 = vcmp.ge.s32.totalorder %v188, 1
    %vm218 = vcmp.le.s32.totalorder %v188, 4
    %vm219 = vmand %vm217, %vm218
    %v220 = vsel %vm219, %v216, 0.0
    %221 = vst [vmem:[#allocation2] sm:$0x1] %v220
    // Predicated region
    $region18: #{tpu_custom_call.1} parent=1 // pred_check
      _
    $region19: #{tpu_custom_call.1} parent=1 // pred_check_branch
      %223 = sbr.rel (0) target = $region21
    $region20: #{tpu_custom_call.1} parent=1 // pred_region
      %225 = vsyncadd [#allocation3], 0
      %s227 = sshll.u32 [#allocation2], 4
      %s228 = int_to_ptr.vmem [resolvable:$true] %s227
      %s229 = sshll.u32 %s4, 4
      %s230 = int_to_ptr.hbm [resolvable:$true] %s229
      %232 = dma.vmem_to_hbm [thread:$0]  %s228, 16, %s230, [#allocation3]
    $region21: #{tpu_custom_call.1} parent=1 // pred_fallthru
      _
    // Predicated region
    $region22: #{tpu_custom_call.1} parent=1 // pred_check
      _
    $region23: #{tpu_custom_call.1} parent=1 // pred_check_branch
      %234 = sbr.rel (0) target = $region25
    $region24: #{tpu_custom_call.1} parent=1 // pred_region
      %236 = dma.done [#allocation3], 16
    $region25: #{tpu_custom_call.1} parent=1 // pred_fallthru
      _
    %237 = vsyncpa [#allocation3], 1

</llo_original>
